<compile_context>
chip_gen: v7x
topology: tpu7x:2x2x1
jax: 0.10.0
libtpu: 0.0.40
codegen_flags: <defaults>
</compile_context>

<pallas_src>
import functools

import jax
import jax.numpy as jnp
from jax.experimental import pallas as pl
from jax.experimental.pallas import tpu as pltpu


def _round_up(a, b):
    return ((a + b - 1) // b) * b


def _vmem_physical_bytes():
    """Per-core physical VMEM (generation-aware; conservative 64 MiB fallback)."""
    try:
        return int(getattr(pltpu.get_tpu_info(), "vmem_capacity_bytes", 64 << 20))
    except Exception:  # info query unavailable -> be conservative (v7x-sized)
        return 64 << 20


def _vmem_estimate(tm, tff, d_model, d_ff, c_bytes, p_bytes, o_bytes):
    b = 0
    b += 2 * tm * d_model * c_bytes            # x tile, double-buffered
    b += 2 * d_model * tff * c_bytes           # W1 block, double-buffered
    b += 2 * tff * d_model * c_bytes           # W2 block, double-buffered
    b += 2 * (d_ff + d_model) * 4              # b1 (full, resident) + b2, f32
    b += 2 * 2 * tm * tff * p_bytes            # pre + post probe tiles
    b += 2 * tm * d_model * o_bytes            # out tile
    b += tm * d_model * 4                      # f32 accumulator scratch
    b += 2 * tm * tff * 4                      # f32 h / g intermediates
    return b


def _mlp_kernel(x_ref, w1_ref, b1_ref, w2_ref, b2_ref,
                pre_ref, post_ref, out_ref, acc_ref, *, approx_gelu):
    j = pl.program_id(1)                       # d_ff slice index (reduction axis)

    @pl.when(j == 0)
    def _():
        acc_ref[...] = jnp.zeros_like(acc_ref)

    x = x_ref[...]                                             # (tm, d_model)
    b1 = b1_ref[j]                                             # (1, tff) f32, resident
    # linear1 slice: x @ W1[:, j*tff:(j+1)*tff] + b1 slice (f32 accumulation on MXU)
    h = jnp.dot(x, w1_ref[...], preferred_element_type=jnp.float32) + b1
    pre_ref[...] = h.astype(pre_ref.dtype)                     # probe: pre_activation

    if approx_gelu:
        # tanh GELU -> transcendental on the EUP (its own VLIW slot).
        c = jnp.float32(0.7978845608028654)                    # sqrt(2/pi)
        g = 0.5 * h * (1.0 + jnp.tanh(c * (h + jnp.float32(0.044715) * h * h * h)))
    else:
        # exact erf GELU, same as torch.nn.functional.gelu default.
        g = 0.5 * h * (1.0 + jax.lax.erf(h * jnp.float32(0.7071067811865476)))
    post_ref[...] = g.astype(post_ref.dtype)                   # probe: post_activation

    # linear2 partial: accumulate g_slice @ W2[j*tff:(j+1)*tff, :] in f32 scratch.
    acc_ref[...] += jnp.dot(g.astype(w2_ref.dtype), w2_ref[...],
                            preferred_element_type=jnp.float32)

    @pl.when(j == pl.num_programs(1) - 1)
    def _():
        # TODO(synk): training-mode dropout mask not implemented (eval: identity).
        out_ref[...] = (acc_ref[...] + b2_ref[...]).astype(out_ref.dtype)


@functools.partial(
    jax.jit,
    static_argnames=("tm", "tff", "compute_dtype", "probe_dtype", "out_dtype",
                     "gelu_approximate"))
def probed_mlp(x, w1, b1, w2, b2, *,
               tm=None, tff=None,
               compute_dtype=jnp.bfloat16, probe_dtype=None, out_dtype=None,
               gelu_approximate=False):
    """Fused ProbedMLP forward.

    x: (batch, seq, d_model); w1 = linear1.weight.T: (d_model, d_ff); b1: (d_ff,);
    w2 = linear2.weight.T: (d_ff, d_model); b2: (d_model,).
    Returns (output, pre_activation, post_activation) with PyTorch shapes.
    compute_dtype=jnp.float32 gives probes faithful to a PyTorch f32 forward; the
    bf16 default trades that for MXU / DMA throughput.
    """
    batch, seq, d_model = x.shape
    d_ff = w1.shape[1]
    if probe_dtype is None:
        probe_dtype = compute_dtype
    if out_dtype is None:
        out_dtype = x.dtype

    c_bytes = jnp.dtype(compute_dtype).itemsize
    p_bytes = jnp.dtype(probe_dtype).itemsize
    o_bytes = jnp.dtype(out_dtype).itemsize
    phys = _vmem_physical_bytes()
    budget = (phys * 7) // 10                  # tile-sizing budget (~45 MiB on v7x)
    M = batch * seq

    # ---- d_ff tiling: keep W1/W2 grid-invariant (VMEM-resident) when they fit.
    if tff is not None:
        if tff >= d_ff:
            tff_eff = d_ff
        else:
            assert d_ff % tff == 0 and tff % 128 == 0, \
                "tff must divide d_ff and be a multiple of 128"
            tff_eff = tff
    else:
        resident_bytes = 2 * (2 * d_model * d_ff * c_bytes) + 2 * (d_ff + d_model) * 4
        if resident_bytes <= budget // 2:
            tff_eff = d_ff                     # weights never restreamed from HBM
        else:
            for cand in (512, 256, 128):       # MXU-wide (256-lane) slices preferred
                if d_ff % cand == 0:
                    tff_eff = cand
                    break
            else:
                tff_eff = d_ff
    n_ff = d_ff // tff_eff

    # ---- M tiling: biggest tile fitting the budget; keep the parallel grid >= 2.
    tm_cap = _round_up(M, 8)
    if tm is None:
        if M >= 16:
            tm_cap = min(tm_cap, _round_up((M + 1) // 2, 8))   # >=2 i-steps (megacore)
        tm_eff = 8
        for cand in (1024, 512, 256, 128, 64, 32, 16, 8):
            cand = min(cand, tm_cap)
            if _vmem_estimate(cand, tff_eff, d_model, d_ff,
                              c_bytes, p_bytes, o_bytes) <= budget:
                tm_eff = cand
                break
    else:
        tm_eff = min(_round_up(tm, 8), tm_cap)
    M_pad = _round_up(M, tm_eff)

    # ---- operand prep (compute_dtype MXU operands, f32 biases) ------------------
    x2d = x.reshape(M, d_model).astype(compute_dtype)
    if M_pad != M:
        x2d = jnp.pad(x2d, ((0, M_pad - M), (0, 0)))
    w1c = w1.astype(compute_dtype)
    w2c = w2.astype(compute_dtype)
    b1_3d = b1.astype(jnp.float32).reshape(n_ff, 1, tff_eff)   # row j = j-th slice
    b2_2d = b2.astype(jnp.float32).reshape(1, d_model)

    est = _vmem_estimate(tm_eff, tff_eff, d_model, d_ff, c_bytes, p_bytes, o_bytes)
    vmem_limit = min(max(32 << 20, int(est * 1.3) + (4 << 20)), (phys * 17) // 20)

    grid = (M_pad // tm_eff, n_ff)                             # reduction axis last
    kernel = functools.partial(_mlp_kernel, approx_gelu=gelu_approximate)

    pre, post, out = pl.pallas_call(
        kernel,
        out_shape=(
            jax.ShapeDtypeStruct((M_pad, d_ff), probe_dtype),
            jax.ShapeDtypeStruct((M_pad, d_ff), probe_dtype),
            jax.ShapeDtypeStruct((M_pad, d_model), out_dtype),
        ),
        grid_spec=pltpu.PrefetchScalarGridSpec(
            num_scalar_prefetch=0,
            grid=grid,
            in_specs=[
                pl.BlockSpec((tm_eff, d_model), lambda i, j: (i, 0)),      # x tile
                pl.BlockSpec((d_model, tff_eff), lambda i, j: (0, j)),     # W1 slice
                pl.BlockSpec((n_ff, 1, tff_eff), lambda i, j: (0, 0, 0)),  # b1 resident
                pl.BlockSpec((tff_eff, d_model), lambda i, j: (j, 0)),     # W2 slice
                pl.BlockSpec((1, d_model), lambda i, j: (0, 0)),           # b2 resident
            ],
            out_specs=[
                pl.BlockSpec((tm_eff, tff_eff), lambda i, j: (i, j)),      # pre probe
                pl.BlockSpec((tm_eff, tff_eff), lambda i, j: (i, j)),      # post probe
                pl.BlockSpec((tm_eff, d_model), lambda i, j: (i, 0)),      # out (resident over j)
            ],
            scratch_shapes=[pltpu.VMEM((tm_eff, d_model), jnp.float32)],
        ),
        compiler_params=pltpu.CompilerParams(
            dimension_semantics=("parallel", "arbitrary"),
            vmem_limit_bytes=vmem_limit),
    )(x2d, w1c, b1_3d, w2c, b2_2d)

    return (out[:M].reshape(batch, seq, d_model),
            pre[:M].reshape(batch, seq, d_ff),
            post[:M].reshape(batch, seq, d_ff))


def _reference(x, w1, b1, w2, b2, approximate=False):
    hp = jax.lax.Precision.HIGHEST
    h = jnp.dot(x, w1, precision=hp) + b1
    g = jax.nn.gelu(h, approximate=approximate)
    return jnp.dot(g, w2, precision=hp) + b2, h, g


def _make_inputs(key, batch, seq, d_model, d_ff):
    kx, k1, k2, k3, k4 = jax.random.split(key, 5)
    x = jax.random.normal(kx, (batch, seq, d_model), dtype=jnp.float32)
    bound1 = 1.0 / (d_model ** 0.5)
    bound2 = 1.0 / (d_ff ** 0.5)
    w1 = jax.random.uniform(k1, (d_model, d_ff), jnp.float32, -bound1, bound1)
    b1 = jax.random.uniform(k2, (d_ff,), jnp.float32, -bound1, bound1)
    w2 = jax.random.uniform(k3, (d_ff, d_model), jnp.float32, -bound2, bound2)
    b2 = jax.random.uniform(k4, (d_model,), jnp.float32, -bound2, bound2)
    return x, w1, b1, w2, b2


if __name__ == "__main__":
    # Case 1: module-spec small shapes (batch=2, seq=8, d_model=32, d_ff=64),
    # f32 MXU path -> probes faithful to the PyTorch (eval) forward.
    x, w1, b1, w2, b2 = _make_inputs(jax.random.PRNGKey(0), 2, 8, 32, 64)
    out, pre_act, post_act = probed_mlp(x, w1, b1, w2, b2,
                                        compute_dtype=jnp.float32)
    jax.block_until_ready(out)
    r_out, r_pre, r_post = _reference(x, w1, b1, w2, b2, approximate=False)
    assert jnp.allclose(out, r_out, atol=1e-4, rtol=1e-4)
    assert jnp.allclose(pre_act, r_pre, atol=1e-4, rtol=1e-4)
    assert jnp.allclose(post_act, r_post, atol=1e-4, rtol=1e-4)

    # Case 2: tanh/EUP GELU variant (perf option) vs the tanh reference.
    out_a, pre_a, post_a = probed_mlp(x, w1, b1, w2, b2,
                                      compute_dtype=jnp.float32,
                                      gelu_approximate=True)
    jax.block_until_ready(out_a)
    ra_out, ra_pre, ra_post = _reference(x, w1, b1, w2, b2, approximate=True)
    assert jnp.allclose(pre_a, ra_pre, atol=1e-4, rtol=1e-4)
    assert jnp.allclose(post_a, ra_post, atol=1e-4, rtol=1e-4)
    assert jnp.allclose(out_a, ra_out, atol=1e-4, rtol=1e-4)

    # Case 3: lane-dense bf16 MXU path + explicit d_ff tiling (f32 accumulation
    # over the innermost "arbitrary" axis) + bf16 probes/output.
    x2, w1b, b1b, w2b, b2b = _make_inputs(jax.random.PRNGKey(1), 2, 64, 128, 256)
    out2, pre2, post2 = probed_mlp(x2, w1b, b1b, w2b, b2b,
                                   compute_dtype=jnp.bfloat16,
                                   out_dtype=jnp.bfloat16,
                                   tff=128)
    jax.block_until_ready(out2)
    r_out2, r_pre2, r_post2 = _reference(x2, w1b, b1b, w2b, b2b, approximate=False)
    assert jnp.allclose(out2.astype(jnp.float32), r_out2, atol=5e-2, rtol=5e-2)
    assert jnp.allclose(pre2.astype(jnp.float32), r_pre2, atol=5e-2, rtol=5e-2)
    assert jnp.allclose(post2.astype(jnp.float32), r_post2, atol=5e-2, rtol=5e-2)

    print("KERNEL_OK")
</pallas_src>

<mosaic_0001>
module attributes {stable_mosaic.version = 11 : i64} {
  func.func @_mlp_kernel(%arg0: i32, %arg1: i32, %arg2: memref<8x32xf32, #tpu.memory_space<vmem>>, %arg3: memref<32x64xf32, #tpu.memory_space<vmem>>, %arg4: memref<1x1x64xf32, #tpu.memory_space<vmem>>, %arg5: memref<64x32xf32, #tpu.memory_space<vmem>>, %arg6: memref<1x32xf32, #tpu.memory_space<vmem>>, %arg7: memref<8x64xf32, #tpu.memory_space<vmem>>, %arg8: memref<8x64xf32, #tpu.memory_space<vmem>>, %arg9: memref<8x32xf32, #tpu.memory_space<vmem>>, %arg10: memref<8x32xf32, #tpu.memory_space<vmem>>) attributes {dimension_semantics = [#tpu.dimension_semantics<parallel>, #tpu.dimension_semantics<arbitrary>], iteration_bounds = array<i64: 2, 1>, scalar_prefetch = 0 : i64, scratch_operands = 1 : i64, tpu.core_type = #tpu.core_type<tc>, window_params = [{transform_indices = @transform_0, window_bounds = array<i64: 8, 32>}, {transform_indices = @transform_1, window_bounds = array<i64: 32, 64>}, {pipeline_mode = #tpu.pipeline_mode<synchronous>, transform_indices = @transform_2, window_bounds = array<i64: 1, 1, 64>}, {transform_indices = @transform_3, window_bounds = array<i64: 64, 32>}, {pipeline_mode = #tpu.pipeline_mode<synchronous>, transform_indices = @transform_4, window_bounds = array<i64: 1, 32>}, {transform_indices = @transform_5, window_bounds = array<i64: 8, 64>}, {transform_indices = @transform_6, window_bounds = array<i64: 8, 64>}, {transform_indices = @transform_7, window_bounds = array<i64: 8, 32>}]} {
    %c0_i32 = arith.constant 0 : i32
    %0 = arith.cmpi eq, %arg1, %c0_i32 : i32
    %1 = arith.extui %0 : i1 to i32
    %c0_i32_0 = arith.constant 0 : i32
    %2 = arith.cmpi ne, %1, %c0_i32_0 : i32
    scf.if %2 {
      %cst_22 = arith.constant 0.000000e+00 : f32
      %29 = vector.broadcast %cst_22 : f32 to vector<8x32xf32>
      %c0_23 = arith.constant 0 : index
      %c0_24 = arith.constant 0 : index
      %30 = vector.load %arg10[%c0_23, %c0_24] : memref<8x32xf32, #tpu.memory_space<vmem>>, vector<8x32xf32>
      tpu.vector_store %arg10[%c0_23, %c0_24], %29 {strides = array<i32>} : memref<8x32xf32, #tpu.memory_space<vmem>>, vector<8x32xf32>,
    } else {
    }
    %c0 = arith.constant 0 : index
    %c0_1 = arith.constant 0 : index
    %3 = vector.load %arg2[%c0, %c0_1] : memref<8x32xf32, #tpu.memory_space<vmem>>, vector<8x32xf32>
    %4 = arith.index_cast %arg1 : i32 to index
    %c0_2 = arith.constant 0 : index
    %c0_3 = arith.constant 0 : index
    %5 = vector.load %arg4[%4, %c0_2, %c0_3] : memref<1x1x64xf32, #tpu.memory_space<vmem>>, vector<1x1x64xf32>
    %6 = vector.shape_cast %5 : vector<1x1x64xf32> to vector<1x64xf32>
    %c0_4 = arith.constant 0 : index
    %c0_5 = arith.constant 0 : index
    %7 = vector.load %arg3[%c0_4, %c0_5] : memref<32x64xf32, #tpu.memory_space<vmem>>, vector<32x64xf32>
    %cst = arith.constant dense<0.000000e+00> : vector<8x64xf32>
    %8 = tpu.matmul %3, %7, %cst {dimension_numbers = #tpu.dot_dimension_numbers<[1], [0], [0], [1], [0, 0, 1, 1], [], []>} : vector<8x32xf32>, vector<32x64xf32>, vector<8x64xf32> -> vector<8x64xf32>
    %9 = vector.broadcast %6 : vector<1x64xf32> to vector<8x64xf32>
    %10 = arith.addf %8, %9 : vector<8x64xf32>
    %c0_6 = arith.constant 0 : index
    %c0_7 = arith.constant 0 : index
    %11 = vector.load %arg7[%c0_6, %c0_7] : memref<8x64xf32, #tpu.memory_space<vmem>>, vector<8x64xf32>
    tpu.vector_store %arg7[%c0_6, %c0_7], %10 {strides = array<i32>} : memref<8x64xf32, #tpu.memory_space<vmem>>, vector<8x64xf32>,
    %cst_8 = arith.constant 5.000000e-01 : f32
    %12 = vector.broadcast %cst_8 : f32 to vector<8x64xf32>
    %13 = arith.mulf %12, %10 : vector<8x64xf32>
    %cst_9 = arith.constant 0.707106769 : f32
    %14 = vector.broadcast %cst_9 : f32 to vector<8x64xf32>
    %15 = arith.mulf %10, %14 : vector<8x64xf32>
    %16 = math.erf %15 : vector<8x64xf32>
    %cst_10 = arith.constant 1.000000e+00 : f32
    %17 = vector.broadcast %cst_10 : f32 to vector<8x64xf32>
    %18 = arith.addf %17, %16 : vector<8x64xf32>
    %19 = arith.mulf %13, %18 : vector<8x64xf32>
    %c0_11 = arith.constant 0 : index
    %c0_12 = arith.constant 0 : index
    %20 = vector.load %arg8[%c0_11, %c0_12] : memref<8x64xf32, #tpu.memory_space<vmem>>, vector<8x64xf32>
    tpu.vector_store %arg8[%c0_11, %c0_12], %19 {strides = array<i32>} : memref<8x64xf32, #tpu.memory_space<vmem>>, vector<8x64xf32>,
    %c0_13 = arith.constant 0 : index
    %c0_14 = arith.constant 0 : index
    %21 = vector.load %arg10[%c0_13, %c0_14] : memref<8x32xf32, #tpu.memory_space<vmem>>, vector<8x32xf32>
    %c0_15 = arith.constant 0 : index
    %c0_16 = arith.constant 0 : index
    %22 = vector.load %arg5[%c0_15, %c0_16] : memref<64x32xf32, #tpu.memory_space<vmem>>, vector<64x32xf32>
    %cst_17 = arith.constant dense<0.000000e+00> : vector<8x32xf32>
    %23 = tpu.matmul %19, %22, %cst_17 {dimension_numbers = #tpu.dot_dimension_numbers<[1], [0], [0], [1], [0, 0, 1, 1], [], []>} : vector<8x64xf32>, vector<64x32xf32>, vector<8x32xf32> -> vector<8x32xf32>
    %24 = arith.addf %21, %23 : vector<8x32xf32>
    %c0_18 = arith.constant 0 : index
    %c0_19 = arith.constant 0 : index
    %25 = vector.load %arg10[%c0_18, %c0_19] : memref<8x32xf32, #tpu.memory_space<vmem>>, vector<8x32xf32>
    tpu.vector_store %arg10[%c0_18, %c0_19], %24 {strides = array<i32>} : memref<8x32xf32, #tpu.memory_space<vmem>>, vector<8x32xf32>,
    %c0_i32_20 = arith.constant 0 : i32
    %26 = arith.cmpi eq, %arg1, %c0_i32_20 : i32
    %27 = arith.extui %26 : i1 to i32
    %c0_i32_21 = arith.constant 0 : i32
    %28 = arith.cmpi ne, %27, %c0_i32_21 : i32
    scf.if %28 {
      %c0_22 = arith.constant 0 : index
      %c0_23 = arith.constant 0 : index
      %29 = vector.load %arg10[%c0_22, %c0_23] : memref<8x32xf32, #tpu.memory_space<vmem>>, vector<8x32xf32>
      %c0_24 = arith.constant 0 : index
      %c0_25 = arith.constant 0 : index
      %30 = vector.load %arg6[%c0_24, %c0_25] : memref<1x32xf32, #tpu.memory_space<vmem>>, vector<1x32xf32>
      %31 = vector.broadcast %30 : vector<1x32xf32> to vector<8x32xf32>
      %32 = arith.addf %29, %31 : vector<8x32xf32>
      %c0_26 = arith.constant 0 : index
      %c0_27 = arith.constant 0 : index
      %33 = vector.load %arg9[%c0_26, %c0_27] : memref<8x32xf32, #tpu.memory_space<vmem>>, vector<8x32xf32>
      tpu.vector_store %arg9[%c0_26, %c0_27], %32 {strides = array<i32>} : memref<8x32xf32, #tpu.memory_space<vmem>>, vector<8x32xf32>,
    } else {
    }
    return
  }
  func.func @transform_0(%arg0: i32, %arg1: i32) -> (i32, i32) {
    %c0_i32 = arith.constant 0 : i32
    %c0_i32_0 = arith.constant 0 : i32
    return %arg0, %c0_i32 : i32, i32
  }
  func.func @transform_1(%arg0: i32, %arg1: i32) -> (i32, i32) {
    %c0_i32 = arith.constant 0 : i32
    %c0_i32_0 = arith.constant 0 : i32
    return %c0_i32, %arg1 : i32, i32
  }
  func.func @transform_2(%arg0: i32, %arg1: i32) -> (i32, i32, i32) {
    %c0_i32 = arith.constant 0 : i32
    %c0_i32_0 = arith.constant 0 : i32
    %c0_i32_1 = arith.constant 0 : i32
    %c0_i32_2 = arith.constant 0 : i32
    return %c0_i32, %c0_i32_0, %c0_i32_1 : i32, i32, i32
  }
  func.func @transform_3(%arg0: i32, %arg1: i32) -> (i32, i32) {
    %c0_i32 = arith.constant 0 : i32
    %c0_i32_0 = arith.constant 0 : i32
    return %arg1, %c0_i32 : i32, i32
  }
  func.func @transform_4(%arg0: i32, %arg1: i32) -> (i32, i32) {
    %c0_i32 = arith.constant 0 : i32
    %c0_i32_0 = arith.constant 0 : i32
    %c0_i32_1 = arith.constant 0 : i32
    return %c0_i32, %c0_i32_0 : i32, i32
  }
  func.func @transform_5(%arg0: i32, %arg1: i32) -> (i32, i32) {
    %c0_i32 = arith.constant 0 : i32
    return %arg0, %arg1 : i32, i32
  }
  func.func @transform_6(%arg0: i32, %arg1: i32) -> (i32, i32) {
    %c0_i32 = arith.constant 0 : i32
    return %arg0, %arg1 : i32, i32
  }
  func.func @transform_7(%arg0: i32, %arg1: i32) -> (i32, i32) {
    %c0_i32 = arith.constant 0 : i32
    %c0_i32_0 = arith.constant 0 : i32
    return %arg0, %c0_i32 : i32, i32
  }
}

</mosaic_0001>

<llo_original>
// kernel: probed_mlp.1
$region0: #{probed_mlp.1}
  #allocation0 [shape = 'u32[]', space=smem, size = 0x4, offset = 0x4, fixed_abs, tag = 'smem constant byte address 0x4 - core index']
  #allocation1 [shape = 'u32[144,128]{1,0:T(1,128)}', space=vmem, size = 0x12000, scoped, tag = 'internal scratch']
  #allocation2 [shape = 'f32[8,32]{1,0:T(8,128)}', space=vmem, size = 0x1000, scoped, tag = 'scratch operand']
  %s0 = inlined_call_operand.vmem [shape: f32[16,32], index: 0, kind: input, shape index: {}]
  %s1 = inlined_call_operand.vmem [shape: f32[32,64], index: 1, kind: input, shape index: {}]
  %s2 = inlined_call_operand.vmem [shape: f32[1,1,64], index: 2, kind: input, shape index: {}]
  %s3 = inlined_call_operand.vmem [shape: f32[64,32], index: 3, kind: input, shape index: {}]
  %s4 = inlined_call_operand.vmem [shape: f32[1,32], index: 4, kind: input, shape index: {}]
  %s5 = inlined_call_operand.hbm [shape: f32[16,64], index: 5, kind: output, shape index: {0}]
  %s6 = inlined_call_operand.hbm [shape: f32[16,64], index: 6, kind: output, shape index: {1}]
  %s7 = inlined_call_operand.hbm [shape: f32[16,32], index: 7, kind: output, shape index: {2}]
  %8 = xla_tuple %s5, %s6, %s7
  %s9 = sld [smem:[#allocation0]]
  $region77: #{probed_mlp.1} parent=0
    _
  %s11 = ssub.s32 1, %s9
  %s12 = scalar_select 0, %s11, %s9
  $region1: #{probed_mlp.1} parent=0
    #allocation3 [shape = 'u8[8192]{0}', space=vmem, size = 0x2000, scoped, tag = 'output window, operand 0']
    #allocation4 [shape = 's32[2]{0}', space=sflag, size = 0x8, scoped, tag = 'scoped memory for probed_mlp.1']
    #allocation5 [shape = 'u8[8192]{0}', space=vmem, size = 0x2000, scoped, tag = 'output window, operand 1']
    #allocation6 [shape = 's32[2]{0}', space=sflag, size = 0x8, scoped, tag = 'scoped memory for probed_mlp.1']
    #allocation7 [shape = 'u8[8192]{0}', space=vmem, size = 0x2000, scoped, tag = 'output window, operand 2']
    %13 = vsyncpa [#allocation4], 0
    %s14 = scalar_lea.sflag [#allocation4], 1
    %15 = vsyncpa %s14, 0
    %16 = vsyncpa [#allocation6], 0
    %s17 = scalar_lea.sflag [#allocation6], 1
    %18 = vsyncpa %s17, 0
    loop: start=0, step=1, limit=4
    $region2: #{probed_mlp.1} parent=1 // loop_pre_header
      _
    $region3: #{probed_mlp.1} parent=1 // loop_header
      %s20 = sphi 0, %s24
      %p21 = scmp.ge.s32.totalorder %s20, 4
      %s27 = sphi 0, %s39
      %s28 = sphi 0, %s35
      %s29 = sphi 0, %s27
      %s30 = sphi 0, %s28
      %s31 = sphi 0, %s29
      %s32 = sphi 0, %s30
      %s42 = sphi 0, %s44
      %s45 = sphi 0, %s42
      %s46 = sphi 0, %s45
      %s62 = sphi 0, %s46
      %s68 = sphi 0, %s70
      %s71 = sphi 0, %s68
      %s72 = sphi 0, %s71
      %s88 = sphi 0, %s72
      %s92 = sphi 0, %s92
      %s94 = sphi 0, %s92
      %s95 = sphi 0, %s94
      %s109 = sphi 0, %s95
      %s115 = sphi 0, %s117
      %s118 = sphi 0, %s115
      %s119 = sphi 0, %s118
      %s135 = sphi 0, %s119
      %s139 = sphi 0, %s139
      %s141 = sphi 0, %s139
      %s142 = sphi 0, %s141
      %s156 = sphi 0, %s142
      %s164 = sphi 0, %s166
      %s167 = sphi 0, %s164
      %s168 = sphi 0, %s167
      %s184 = sphi 0, %s168
      %s192 = sphi 0, %s194
      %s195 = sphi 0, %s192
      %s196 = sphi 0, %s195
      %s212 = sphi 0, %s196
      %s218 = sphi 0, %s220
      %s221 = sphi 0, %s218
      %s222 = sphi 0, %s221
      %s238 = sphi 0, %s222
    $region4: #{probed_mlp.1} parent=1 // loop_header_branch
      %23 = sbr.rel (%p21) target = $region8
    $region5: #{probed_mlp.1} parent=1 // loop_body
      %s25 = ssub.s32 %s20, 1
      %s26 = ssub.s32 %s20, 2
      %s33 = sadd.s32 1, %s28
      %p34 = scmp.ge.s32.totalorder %s33, 1
      %s35 = scalar_select %p34, 0, %s33
      %s36 = sadd.s32 1, %s27
      %s37 = scalar_select %p34, %s36, %s27
      %p38 = scmp.ge.s32.totalorder %s37, 2
      %s39 = scalar_select %p38, 0, %s37
      %s40 = ssub.s32 %s27, %s39
      %p41 = scmp.eq.s32.totalorder %s40, 0
      %s43 = sadd.s32 %s42, 1
      %s44 = scalar_select %p41, %s42, %s43
      %p47 = pneg %p41
      %p48 = scmp.eq.s32.totalorder %s20, 1
      %p49 = por %p47, %p48
      %p50 = scmp.ne.s32.totalorder %s42, %s45
      %p51 = scmp.eq.s32.totalorder %s20, 0
      %p52 = por %p50, %p51
      %p53 = scmp.ne.s32.totalorder %s42, %s45
      %p54 = scmp.eq.s32.totalorder %s25, 1
      %p55 = por %p53, %p54
      %p56 = scmp.ne.s32.totalorder %s45, %s46
      %p57 = scmp.eq.s32.totalorder %s25, 0
      %p58 = por %p56, %p57
      %p59 = scmp.ne.s32.totalorder %s45, %s46
      %p60 = scmp.eq.s32.totalorder %s26, 1
      %p61 = por %p59, %p60
      %p63 = scmp.ne.s32.totalorder %s46, %s62
      %p64 = scmp.eq.s32.totalorder %s26, 0
      %p65 = por %p63, %p64
      %s66 = ssub.s32 %s28, %s35
      %p67 = scmp.eq.s32.totalorder %s66, 0
      %s69 = sadd.s32 %s68, 1
      %s70 = scalar_select %p67, %s68, %s69
      %p73 = pneg %p67
      %p74 = scmp.eq.s32.totalorder %s20, 1
      %p75 = por %p73, %p74
      %p76 = scmp.ne.s32.totalorder %s68, %s71
      %p77 = scmp.eq.s32.totalorder %s20, 0
      %p78 = por %p76, %p77
      %p79 = scmp.ne.s32.totalorder %s68, %s71
      %p80 = scmp.eq.s32.totalorder %s25, 1
      %p81 = por %p79, %p80
      %p82 = scmp.ne.s32.totalorder %s71, %s72
      %p83 = scmp.eq.s32.totalorder %s25, 0
      %p84 = por %p82, %p83
      %p85 = scmp.ne.s32.totalorder %s71, %s72
      %p86 = scmp.eq.s32.totalorder %s26, 1
      %p87 = por %p85, %p86
      %p89 = scmp.ne.s32.totalorder %s72, %s88
      %p90 = scmp.eq.s32.totalorder %s26, 0
      %p91 = por %p89, %p90
      %s93 = sadd.s32 %s92, 1
      %p96 = scmp.eq.s32.totalorder %s20, 1
      %p97 = scmp.ne.s32.totalorder %s92, %s94
      %p98 = scmp.eq.s32.totalorder %s20, 0
      %p99 = por %p97, %p98
      %p100 = scmp.ne.s32.totalorder %s92, %s94
      %p101 = scmp.eq.s32.totalorder %s25, 1
      %p102 = por %p100, %p101
      %p103 = scmp.ne.s32.totalorder %s94, %s95
      %p104 = scmp.eq.s32.totalorder %s25, 0
      %p105 = por %p103, %p104
      %p106 = scmp.ne.s32.totalorder %s94, %s95
      %p107 = scmp.eq.s32.totalorder %s26, 1
      %p108 = por %p106, %p107
      %p110 = scmp.ne.s32.totalorder %s95, %s109
      %p111 = scmp.eq.s32.totalorder %s26, 0
      %p112 = por %p110, %p111
      %s113 = ssub.s32 %s28, %s35
      %p114 = scmp.eq.s32.totalorder %s113, 0
      %s116 = sadd.s32 %s115, 1
      %s117 = scalar_select %p114, %s115, %s116
      %p120 = pneg %p114
      %p121 = scmp.eq.s32.totalorder %s20, 1
      %p122 = por %p120, %p121
      %p123 = scmp.ne.s32.totalorder %s115, %s118
      %p124 = scmp.eq.s32.totalorder %s20, 0
      %p125 = por %p123, %p124
      %p126 = scmp.ne.s32.totalorder %s115, %s118
      %p127 = scmp.eq.s32.totalorder %s25, 1
      %p128 = por %p126, %p127
      %p129 = scmp.ne.s32.totalorder %s118, %s119
      %p130 = scmp.eq.s32.totalorder %s25, 0
      %p131 = por %p129, %p130
      %p132 = scmp.ne.s32.totalorder %s118, %s119
      %p133 = scmp.eq.s32.totalorder %s26, 1
      %p134 = por %p132, %p133
      %p136 = scmp.ne.s32.totalorder %s119, %s135
      %p137 = scmp.eq.s32.totalorder %s26, 0
      %p138 = por %p136, %p137
      %s140 = sadd.s32 %s139, 1
      %p143 = scmp.eq.s32.totalorder %s20, 1
      %p144 = scmp.ne.s32.totalorder %s139, %s141
      %p145 = scmp.eq.s32.totalorder %s20, 0
      %p146 = por %p144, %p145
      %p147 = scmp.ne.s32.totalorder %s139, %s141
      %p148 = scmp.eq.s32.totalorder %s25, 1
      %p149 = por %p147, %p148
      %p150 = scmp.ne.s32.totalorder %s141, %s142
      %p151 = scmp.eq.s32.totalorder %s25, 0
      %p152 = por %p150, %p151
      %p153 = scmp.ne.s32.totalorder %s141, %s142
      %p154 = scmp.eq.s32.totalorder %s26, 1
      %p155 = por %p153, %p154
      %p157 = scmp.ne.s32.totalorder %s142, %s156
      %p158 = scmp.eq.s32.totalorder %s26, 0
      %p159 = por %p157, %p158
      %s160 = ssub.s32 %s27, %s39
      %s161 = ssub.s32 %s28, %s35
      %s162 = sor.u32 %s160, %s161
      %p163 = scmp.eq.s32.totalorder %s162, 0
      %s165 = sadd.s32 %s164, 1
      %s166 = scalar_select %p163, %s164, %s165
      %p169 = pneg %p163
      %p170 = scmp.eq.s32.totalorder %s20, 1
      %p171 = por %p169, %p170
      %p172 = scmp.ne.s32.totalorder %s164, %s167
      %p173 = scmp.eq.s32.totalorder %s20, 0
      %p174 = por %p172, %p173
      %p175 = scmp.ne.s32.totalorder %s164, %s167
      %p176 = scmp.eq.s32.totalorder %s25, 1
      %p177 = por %p175, %p176
      %p178 = scmp.ne.s32.totalorder %s167, %s168
      %p179 = scmp.eq.s32.totalorder %s25, 0
      %p180 = por %p178, %p179
      %p181 = scmp.ne.s32.totalorder %s167, %s168
      %p182 = scmp.eq.s32.totalorder %s26, 1
      %p183 = por %p181, %p182
      %p185 = scmp.ne.s32.totalorder %s168, %s184
      %p186 = scmp.eq.s32.totalorder %s26, 0
      %p187 = por %p185, %p186
      %s188 = ssub.s32 %s27, %s39
      %s189 = ssub.s32 %s28, %s35
      %s190 = sor.u32 %s188, %s189
      %p191 = scmp.eq.s32.totalorder %s190, 0
      %s193 = sadd.s32 %s192, 1
      %s194 = scalar_select %p191, %s192, %s193
      %p197 = pneg %p191
      %p198 = scmp.eq.s32.totalorder %s20, 1
      %p199 = por %p197, %p198
      %p200 = scmp.ne.s32.totalorder %s192, %s195
      %p201 = scmp.eq.s32.totalorder %s20, 0
      %p202 = por %p200, %p201
      %p203 = scmp.ne.s32.totalorder %s192, %s195
      %p204 = scmp.eq.s32.totalorder %s25, 1
      %p205 = por %p203, %p204
      %p206 = scmp.ne.s32.totalorder %s195, %s196
      %p207 = scmp.eq.s32.totalorder %s25, 0
      %p208 = por %p206, %p207
      %p209 = scmp.ne.s32.totalorder %s195, %s196
      %p210 = scmp.eq.s32.totalorder %s26, 1
      %p211 = por %p209, %p210
      %p213 = scmp.ne.s32.totalorder %s196, %s212
      %p214 = scmp.eq.s32.totalorder %s26, 0
      %p215 = por %p213, %p214
      %s216 = ssub.s32 %s27, %s39
      %p217 = scmp.eq.s32.totalorder %s216, 0
      %s219 = sadd.s32 %s218, 1
      %s220 = scalar_select %p217, %s218, %s219
      %p223 = pneg %p217
      %p224 = scmp.eq.s32.totalorder %s20, 1
      %p225 = por %p223, %p224
      %p226 = scmp.ne.s32.totalorder %s218, %s221
      %p227 = scmp.eq.s32.totalorder %s20, 0
      %p228 = por %p226, %p227
      %p229 = scmp.ne.s32.totalorder %s218, %s221
      %p230 = scmp.eq.s32.totalorder %s25, 1
      %p231 = por %p229, %p230
      %p232 = scmp.ne.s32.totalorder %s221, %s222
      %p233 = scmp.eq.s32.totalorder %s25, 0
      %p234 = por %p232, %p233
      %p235 = scmp.ne.s32.totalorder %s221, %s222
      %p236 = scmp.eq.s32.totalorder %s26, 1
      %p237 = por %p235, %p236
      %p239 = scmp.ne.s32.totalorder %s222, %s238
      %p240 = scmp.eq.s32.totalorder %s26, 0
      %p241 = por %p239, %p240
      %p242 = scmp.le.s32.totalorder 1, %s20
      %p243 = scmp.lt.s32.totalorder %s20, 3
      %p244 = pnand %p242, %p243
      %p245 = pneg %p244
      // Predicated region
      $region9: #{probed_mlp.1} parent=5 // pred_check
        _
      $region10: #{probed_mlp.1} parent=5 // pred_check_branch
        %247 = sbr.rel (%p244) target = $region12
      $region11: #{probed_mlp.1} parent=5 // pred_region
        %s248 = ssub.s32 %s20, 1
        // Predicated region
        $region13: #{probed_mlp.1} parent=11 // pred_check
          %p249 = pneg %p84
        $region14: #{probed_mlp.1} parent=11 // pred_check_branch
          %251 = sbr.rel (%p249) target = $region16
        $region15: #{probed_mlp.1} parent=11 // pred_region
          %p252 = scmp.lt.s32.totalorder %s30, 0
          %s253 = scalar_select %p252, %s30, 0
          %s254 = smul.addr %s253, 8
          %s255 = scalar_lea.vmem %s1, %s254
        $region16: #{probed_mlp.1} parent=11 // pred_fallthru
          _
        // Predicated region
        $region17: #{probed_mlp.1} parent=11 // pred_check
          %p256 = pneg %p105
        $region18: #{probed_mlp.1} parent=11 // pred_check_branch
          %258 = sbr.rel (%p256) target = $region20
        $region19: #{probed_mlp.1} parent=11 // pred_region
          _
        $region20: #{probed_mlp.1} parent=11 // pred_fallthru
          _
        // Predicated region
        $region21: #{probed_mlp.1} parent=11 // pred_check
          %p259 = pneg %p131
        $region22: #{probed_mlp.1} parent=11 // pred_check_branch
          %261 = sbr.rel (%p259) target = $region24
        $region23: #{probed_mlp.1} parent=11 // pred_region
          %s262 = smul.u32 8, %s30
          %p263 = scmp.lt.s32.totalorder %s262, 7
          %s264 = scalar_select %p263, %s262, 7
          %s265 = smul.addr %s264, 8
          %s266 = scalar_lea.vmem %s3, %s265
          %s267 = smul.u32 8, %s30
        $region24: #{probed_mlp.1} parent=11 // pred_fallthru
          _
        // Predicated region
        $region25: #{probed_mlp.1} parent=11 // pred_check
          %p268 = pneg %p152
        $region26: #{probed_mlp.1} parent=11 // pred_check_branch
          %270 = sbr.rel (%p268) target = $region28
        $region27: #{probed_mlp.1} parent=11 // pred_region
          _
        $region28: #{probed_mlp.1} parent=11 // pred_fallthru
          _
      $region12: #{probed_mlp.1} parent=5 // pred_fallthru
        _
      %p271 = scmp.lt.s32.totalorder %s20, 2
      // Predicated region
      $region29: #{probed_mlp.1} parent=5 // pred_check
        %p272 = pneg %p271
      $region30: #{probed_mlp.1} parent=5 // pred_check_branch
        %274 = sbr.rel (%p272) target = $region32
      $region31: #{probed_mlp.1} parent=5 // pred_region
        // Predicated region
        $region33: #{probed_mlp.1} parent=31 // pred_check
          %p275 = pneg %p52
        $region34: #{probed_mlp.1} parent=31 // pred_check_branch
          %277 = sbr.rel (%p275) target = $region36
        $region35: #{probed_mlp.1} parent=31 // pred_region
          %p278 = scmp.lt.s32.totalorder %s27, 1
          %s279 = scalar_select %p278, %s27, 1
          %s280 = smul.addr %s279, 8
          %s281 = scalar_lea.vmem %s0, %s280
        $region36: #{probed_mlp.1} parent=31 // pred_fallthru
          _
      $region32: #{probed_mlp.1} parent=5 // pred_fallthru
        _
      %p282 = scmp.le.s32.totalorder 1, %s20
      %p283 = scmp.lt.s32.totalorder %s20, 3
      %p284 = pnand %p282, %p283
      %p285 = pneg %p284
      // Predicated region
      $region37: #{probed_mlp.1} parent=5 // pred_check
        _
      $region38: #{probed_mlp.1} parent=5 // pred_check_branch
        %287 = sbr.rel (%p284) target = $region40
      $region39: #{probed_mlp.1} parent=5 // pred_region
        %s288 = ssub.s32 %s20, 1
        %p289 = scmp.lt.s32.totalorder %s29, 1
        %s290 = scalar_select %p289, %s29, 1
        %s291 = smul.addr %s290, 8
        %s292 = scalar_lea.vmem %s0, %s291
        %p293 = pneg %p58
        %p294 = pneg %p55
        %p295 = scmp.lt.s32.totalorder %s30, 0
        %s296 = scalar_select %p295, %s30, 0
        %s297 = smul.addr %s296, 8
        %s298 = scalar_lea.vmem %s1, %s297
        %p299 = pneg %p84
        %p300 = pneg %p81
        %p301 = pneg %p105
        %p302 = pneg %p102
        %s303 = smul.u32 8, %s30
        %p304 = scmp.lt.s32.totalorder %s303, 7
        %s305 = scalar_select %p304, %s303, 7
        %s306 = smul.addr %s305, 8
        %s307 = scalar_lea.vmem %s3, %s306
        %p308 = pneg %p131
        %p309 = pneg %p128
        %p310 = pneg %p152
        %p311 = pneg %p149
        %p312 = pneg %p180
        %p313 = pneg %p177
        %s314 = sand.u32 %s167, 1
        %s315 = scalar_lea.sflag [#allocation4], %s314
        %s316 = sand.u32 %s167, 1
        %s317 = smul.addr %s316, 8
        %s318 = scalar_lea.vmem [#allocation3], %s317
        %p319 = pneg %p208
        %p320 = pneg %p205
        %s321 = sand.u32 %s25, 1
        %s322 = scalar_lea.sflag [#allocation6], %s321
        %s323 = sand.u32 %s195, 1
        %s324 = smul.addr %s323, 8
        %s325 = scalar_lea.vmem [#allocation5], %s324
        %p326 = pneg %p234
        %p327 = pneg %p231
        %s328 = sand.u32 %s25, 1
        %s329 = scalar_lea.sflag [#allocation6], %s328
        %s330 = sand.u32 %s221, 1
        %s331 = smul.addr %s330, 8
        %s332 = scalar_lea.vmem [#allocation7], %s331
        %p333 = scmp.lt.s32.totalorder %s29, 1
        %s334 = scalar_select %p333, %s29, 1
        %s335 = smul.addr %s334, 8
        %s336 = scalar_lea.vmem %s0, %s335
        %p337 = scmp.lt.s32.totalorder %s30, 0
        %s338 = scalar_select %p337, %s30, 0
        %s339 = smul.addr %s338, 8
        %s340 = scalar_lea.vmem %s1, %s339
        %s341 = smul.u32 8, %s30
        %p342 = scmp.lt.s32.totalorder %s341, 7
        %s343 = scalar_select %p342, %s341, 7
        %s344 = smul.addr %s343, 8
        %s345 = scalar_lea.vmem %s3, %s344
        %s346 = smul.u32 8, %s30
        %p347 = scmp.eq.s32.totalorder %s30, 0
        // Predicated region
        $region41: #{probed_mlp.1} parent=39 // pred_check
          %p348 = pneg %p347
        $region42: #{probed_mlp.1} parent=39 // pred_check_branch
          %350 = sbr.rel (%p348) target = $region44
        $region43: #{probed_mlp.1} parent=39 // pred_region
          %vm351 = vcmask 261120
          %352 = vst.msk [vmem:[#allocation2] sm:$0xff] %vm351, 0.0
        $region44: #{probed_mlp.1} parent=39 // pred_fallthru
          _
        %v353 = vld [vmem:[%s336] sm:$0xff]
        %s354 = scalar_lea.vmem %s2, %s30
        %v355 = vld [vmem:[%s354] sm:$0x1]
        %v356 = vld [vmem:[%s340] sm:$0xff]
        %v357 = vld [vmem:[%s340 + $0x8] sm:$0xff]
        %v358 = vld [vmem:[%s340 + $0x10] sm:$0xff]
        %v359 = vld [vmem:[%s340 + $0x18] sm:$0xff]
        %v361 = vlaneseq
        %v362 = vshrl.u32 %v361, 7
        %v363 = vsub.s32 0, %v362
        %v364 = vrot.slane %v355, %v363
        %vm366 = vcmask 261120
        %v368 = vsel %vm366, %v353, 0
        %370 = vmatprep.subr.mxu0 0.0
        %371 = vmatpush1.msra.mxu0 %v356
        %372 = vmatprep.subr.mxu0 0.0
        %373 = vmatpush1.msra.mxu0 %v357
        %374 = vmatprep.subr.mxu0 0.0
        %375 = vmatpush1.msra.mxu0 %v358
        %376 = vmatprep.subr.mxu0 0.0
        %377 = vmatpush1.msra.mxu0 %v359
        %378 = vmatprep.subr.mxu0 0.0
        %379 = vmatpush1.msra.mxu0 0.0
        %380 = vmatprep.subr.mxu0 0.0
        %381 = vmatpush1.msra.mxu0 0.0
        %382 = vmatprep.subr.mxu0 0.0
        %383 = vmatpush1.msra.mxu0 0.0
        %384 = vmatprep.subr.mxu0 0.0
        %385 = vmatpush1.msra.mxu0 0.0
        %386 = vmatprep.subr.mxu0 0.0
        %387 = vmatpush1.msra.mxu0 0.0
        %388 = vmatprep.subr.mxu0 0.0
        %389 = vmatpush1.msra.mxu0 0.0
        %390 = vmatprep.subr.mxu0 0.0
        %391 = vmatpush1.msra.mxu0 0.0
        %392 = vmatprep.subr.mxu0 0.0
        %393 = vmatpush1.msra.mxu0 0.0
        %394 = vmatprep.subr.mxu0 0.0
        %395 = vmatpush1.msra.mxu0 0.0
        %396 = vmatprep.subr.mxu0 0.0
        %397 = vmatpush1.msra.mxu0 0.0
        %398 = vmatprep.subr.mxu0 0.0
        %399 = vmatpush1.msra.mxu0 0.0
        %400 = vmatprep.subr.mxu0 0.0
        %401 = vmatpush1.msra.mxu0 0.0
        %402 = vmatprep.subr.mxu0 0.0
        %403 = vmatpush1.msra.mxu0 0.0
        %404 = vmatprep.subr.mxu0 0.0
        %405 = vmatpush1.msra.mxu0 0.0
        %406 = vmatprep.subr.mxu0 0.0
        %407 = vmatpush1.msra.mxu0 0.0
        %408 = vmatprep.subr.mxu0 0.0
        %409 = vmatpush1.msra.mxu0 0.0
        %410 = vmatprep.subr.mxu0 0.0
        %411 = vmatpush1.msra.mxu0 0.0
        %412 = vmatprep.subr.mxu0 0.0
        %413 = vmatpush1.msra.mxu0 0.0
        %414 = vmatprep.subr.mxu0 0.0
        %415 = vmatpush1.msra.mxu0 0.0
        %416 = vmatprep.subr.mxu0 0.0
        %417 = vmatpush1.msra.mxu0 0.0
        %418 = vmatprep.subr.mxu0 0.0
        %419 = vmatpush1.msra.mxu0 0.0
        %420 = vmatprep.subr.mxu0 0.0
        %421 = vmatpush1.msra.mxu0 0.0
        %422 = vmatprep.subr.mxu0 0.0
        %423 = vmatpush1.msra.mxu0 0.0
        %424 = vmatprep.subr.mxu0 0.0
        %425 = vmatpush1.msra.mxu0 0.0
        %426 = vmatprep.subr.mxu0 0.0
        %427 = vmatpush1.msra.mxu0 0.0
        %428 = vmatprep.subr.mxu0 0.0
        %429 = vmatpush1.msra.mxu0 0.0
        %430 = vmatprep.subr.mxu0 0.0
        %431 = vmatpush1.msra.mxu0 0.0
        %432 = vmatprep.subr.mxu0 0.0
        %433 = vmatpush1.msra.mxu0 0.0
        %434 = vmatprep.mubr.f32.mxu0 0.0
        %435 = vmatmul.mubr.f32.gmra.mrb[0].mxu0 %v368
        %v436 = vpop.f32.mrb[0].mxu0
        %v437 = vadd.f32 %v364, %v436
        %v438 = vpop.f32.mrb[0].mxu0
        %439 = vdwg.mxu0
        %vm440 = vcmask 523264
        %441 = vst.msk [vmem:[%s318] sm:$0xff] %vm440, %v437
        %v442 = vmul.f32 %v437, 0.5
        %v443 = vmul.f32 %v437, 0.70710677
        %v444 = verf.f32.pop %v443
        %v445 = vadd.f32 %v444, 1.0
        %v446 = vmul.f32 %v442, %v445
        %447 = vst.msk [vmem:[%s325] sm:$0xff] %vm440, %v446
        %v448 = vld [vmem:[#allocation2] sm:$0xff]
        %v449 = vld [vmem:[%s345] sm:$0xff]
        %v450 = vld [vmem:[%s345 + $0x8] sm:$0xff]
        %v451 = vld [vmem:[%s345 + $0x10] sm:$0xff]
        %v452 = vld [vmem:[%s345 + $0x18] sm:$0xff]
        %v453 = vld [vmem:[%s345 + $0x20] sm:$0xff]
        %v454 = vld [vmem:[%s345 + $0x28] sm:$0xff]
        %v455 = vld [vmem:[%s345 + $0x30] sm:$0xff]
        %v456 = vld [vmem:[%s345 + $0x38] sm:$0xff]
        %v458 = vsel %vm440, %v446, 0
        %460 = vmatprep.subr.mxu0 0.0
        %461 = vmatpush1.msra.mxu0 %v449
        %462 = vmatprep.subr.mxu0 0.0
        %463 = vmatpush1.msra.mxu0 %v450
        %464 = vmatprep.subr.mxu0 0.0
        %465 = vmatpush1.msra.mxu0 %v451
        %466 = vmatprep.subr.mxu0 0.0
        %467 = vmatpush1.msra.mxu0 %v452
        %468 = vmatprep.subr.mxu0 0.0
        %469 = vmatpush1.msra.mxu0 %v453
        %470 = vmatprep.subr.mxu0 0.0
        %471 = vmatpush1.msra.mxu0 %v454
        %472 = vmatprep.subr.mxu0 0.0
        %473 = vmatpush1.msra.mxu0 %v455
        %474 = vmatprep.subr.mxu0 0.0
        %475 = vmatpush1.msra.mxu0 %v456
        %476 = vmatprep.subr.mxu0 0.0
        %477 = vmatpush1.msra.mxu0 0.0
        %478 = vmatprep.subr.mxu0 0.0
        %479 = vmatpush1.msra.mxu0 0.0
        %480 = vmatprep.subr.mxu0 0.0
        %481 = vmatpush1.msra.mxu0 0.0
        %482 = vmatprep.subr.mxu0 0.0
        %483 = vmatpush1.msra.mxu0 0.0
        %484 = vmatprep.subr.mxu0 0.0
        %485 = vmatpush1.msra.mxu0 0.0
        %486 = vmatprep.subr.mxu0 0.0
        %487 = vmatpush1.msra.mxu0 0.0
        %488 = vmatprep.subr.mxu0 0.0
        %489 = vmatpush1.msra.mxu0 0.0
        %490 = vmatprep.subr.mxu0 0.0
        %491 = vmatpush1.msra.mxu0 0.0
        %492 = vmatprep.subr.mxu0 0.0
        %493 = vmatpush1.msra.mxu0 0.0
        %494 = vmatprep.subr.mxu0 0.0
        %495 = vmatpush1.msra.mxu0 0.0
        %496 = vmatprep.subr.mxu0 0.0
        %497 = vmatpush1.msra.mxu0 0.0
        %498 = vmatprep.subr.mxu0 0.0
        %499 = vmatpush1.msra.mxu0 0.0
        %500 = vmatprep.subr.mxu0 0.0
        %501 = vmatpush1.msra.mxu0 0.0
        %502 = vmatprep.subr.mxu0 0.0
        %503 = vmatpush1.msra.mxu0 0.0
        %504 = vmatprep.subr.mxu0 0.0
        %505 = vmatpush1.msra.mxu0 0.0
        %506 = vmatprep.subr.mxu0 0.0
        %507 = vmatpush1.msra.mxu0 0.0
        %508 = vmatprep.subr.mxu0 0.0
        %509 = vmatpush1.msra.mxu0 0.0
        %510 = vmatprep.subr.mxu0 0.0
        %511 = vmatpush1.msra.mxu0 0.0
        %512 = vmatprep.subr.mxu0 0.0
        %513 = vmatpush1.msra.mxu0 0.0
        %514 = vmatprep.subr.mxu0 0.0
        %515 = vmatpush1.msra.mxu0 0.0
        %516 = vmatprep.subr.mxu0 0.0
        %517 = vmatpush1.msra.mxu0 0.0
        %518 = vmatprep.subr.mxu0 0.0
        %519 = vmatpush1.msra.mxu0 0.0
        %520 = vmatprep.subr.mxu0 0.0
        %521 = vmatpush1.msra.mxu0 0.0
        %522 = vmatprep.subr.mxu0 0.0
        %523 = vmatpush1.msra.mxu0 0.0
        %524 = vmatprep.mubr.f32.mxu0 0.0
        %525 = vmatmul.mubr.f32.gmra.mrb[0].mxu0 %v458
        %v526 = vpop.f32.mrb[0].mxu0
        %v527 = vadd.f32 0.0, %v526
        %v528 = vpop.f32.mrb[0].mxu0
        %529 = vdwg.mxu0
        %v530 = vadd.f32 %v448, %v527
        %531 = vst.msk [vmem:[#allocation2] sm:$0xff] %vm366, %v530
        // Predicated region
        $region45: #{probed_mlp.1} parent=39 // pred_check
          %p532 = pneg %p347
        $region46: #{probed_mlp.1} parent=39 // pred_check_branch
          %534 = sbr.rel (%p532) target = $region48
        $region47: #{probed_mlp.1} parent=39 // pred_region
          %v535 = vld [vmem:[#allocation2] sm:$0xff]
          %v536 = vld [vmem:[%s4] sm:$0x1]
          %v538 = vlaneseq
          %v539 = vshrl.u32 %v538, 7
          %v540 = vsub.s32 0, %v539
          %v541 = vrot.slane %v536, %v540
          %v543 = vadd.f32 %v535, %v541
          %544 = vst.msk [vmem:[%s332] sm:$0xff] %vm366, %v543
        $region48: #{probed_mlp.1} parent=39 // pred_fallthru
          _
        %s545 = sand.u32 %s167, 1
        %s546 = scalar_lea.sflag [#allocation4], %s545
        %s547 = sand.u32 %s167, 1
        %s548 = smul.addr %s547, 8
        %s549 = scalar_lea.vmem [#allocation3], %s548
        %s550 = sand.u32 %s25, 1
        %s551 = scalar_lea.sflag [#allocation6], %s550
        %s552 = sand.u32 %s195, 1
        %s553 = smul.addr %s552, 8
        %s554 = scalar_lea.vmem [#allocation5], %s553
        %s555 = sand.u32 %s25, 1
        %s556 = scalar_lea.sflag [#allocation6], %s555
        %s557 = sand.u32 %s221, 1
        %s558 = smul.addr %s557, 8
        %s559 = scalar_lea.vmem [#allocation7], %s558
        // Predicated region
        $region49: #{probed_mlp.1} parent=39 // pred_check
          %p560 = pneg %p177
        $region50: #{probed_mlp.1} parent=39 // pred_check_branch
          %562 = sbr.rel (%p560) target = $region52
        $region51: #{probed_mlp.1} parent=39 // pred_region
          %s564 = ssub.s32 128, 128
          %565 = vsyncadd %s546, %s564
          %s566 = sadd.s32 %s30, %s29
          %s567 = smul.addr %s566, 128
          %s568 = scalar_lea.hbm %s5, %s567
          %s570 = sshll.u32 %s549, 4
          %s571 = int_to_ptr.vmem [resolvable:$true] %s570
          %573 = dma.vmem_to_hbm [thread:$0]  %s571, 128, %s568, %s546
        $region52: #{probed_mlp.1} parent=39 // pred_fallthru
          _
        // Predicated region
        $region53: #{probed_mlp.1} parent=39 // pred_check
          %p574 = pneg %p205
        $region54: #{probed_mlp.1} parent=39 // pred_check_branch
          %576 = sbr.rel (%p574) target = $region56
        $region55: #{probed_mlp.1} parent=39 // pred_region
          %s578 = ssub.s32 128, 128
          %579 = vsyncadd %s551, %s578
          %s580 = sadd.s32 %s30, %s29
          %s581 = smul.addr %s580, 128
          %s582 = scalar_lea.hbm %s6, %s581
          %s584 = sshll.u32 %s554, 4
          %s585 = int_to_ptr.vmem [resolvable:$true] %s584
          %587 = dma.vmem_to_hbm [thread:$0]  %s585, 128, %s582, %s551
        $region56: #{probed_mlp.1} parent=39 // pred_fallthru
          _
        // Predicated region
        $region57: #{probed_mlp.1} parent=39 // pred_check
          %p588 = pneg %p231
        $region58: #{probed_mlp.1} parent=39 // pred_check_branch
          %590 = sbr.rel (%p588) target = $region60
        $region59: #{probed_mlp.1} parent=39 // pred_region
          %s592 = ssub.s32 128, 128
          %593 = vsyncadd %s556, %s592
          %s594 = smul.addr %s29, 128
          %s595 = scalar_lea.hbm %s7, %s594
          %s597 = sshll.u32 %s559, 4
          %s598 = int_to_ptr.vmem [resolvable:$true] %s597
          %600 = dma.vmem_to_hbm [thread:$0]  %s598, 128, %s595, %s556
        $region60: #{probed_mlp.1} parent=39 // pred_fallthru
          _
      $region40: #{probed_mlp.1} parent=5 // pred_fallthru
        _
      %p601 = scmp.le.s32.totalorder 2, %s20
      // Predicated region
      $region61: #{probed_mlp.1} parent=5 // pred_check
        %p602 = pneg %p601
      $region62: #{probed_mlp.1} parent=5 // pred_check_branch
        %604 = sbr.rel (%p602) target = $region64
      $region63: #{probed_mlp.1} parent=5 // pred_region
        %s605 = ssub.s32 %s20, 2
        // Predicated region
        $region65: #{probed_mlp.1} parent=63 // pred_check
          %p606 = pneg %p183
        $region66: #{probed_mlp.1} parent=63 // pred_check_branch
          %608 = sbr.rel (%p606) target = $region68
        $region67: #{probed_mlp.1} parent=63 // pred_region
          %s609 = sand.u32 %s168, 1
          %s610 = scalar_lea.sflag [#allocation4], %s609
          %s611 = sand.u32 %s168, 1
          %s612 = smul.addr %s611, 8
          %s613 = scalar_lea.vmem [#allocation3], %s612
          %614 = dma.done %s610, 128
        $region68: #{probed_mlp.1} parent=63 // pred_fallthru
          _
        // Predicated region
        $region69: #{probed_mlp.1} parent=63 // pred_check
          %p615 = pneg %p211
        $region70: #{probed_mlp.1} parent=63 // pred_check_branch
          %617 = sbr.rel (%p615) target = $region72
        $region71: #{probed_mlp.1} parent=63 // pred_region
          %s618 = sand.u32 %s26, 1
          %s619 = scalar_lea.sflag [#allocation6], %s618
          %s620 = sand.u32 %s196, 1
          %s621 = smul.addr %s620, 8
          %s622 = scalar_lea.vmem [#allocation5], %s621
          %623 = dma.done %s619, 128
        $region72: #{probed_mlp.1} parent=63 // pred_fallthru
          _
        // Predicated region
        $region73: #{probed_mlp.1} parent=63 // pred_check
          %p624 = pneg %p237
        $region74: #{probed_mlp.1} parent=63 // pred_check_branch
          %626 = sbr.rel (%p624) target = $region76
        $region75: #{probed_mlp.1} parent=63 // pred_region
          %s627 = sand.u32 %s26, 1
          %s628 = scalar_lea.sflag [#allocation6], %s627
          %s629 = sand.u32 %s222, 1
          %s630 = smul.addr %s629, 8
          %s631 = scalar_lea.vmem [#allocation7], %s630
          %632 = dma.done %s628, 128
        $region76: #{probed_mlp.1} parent=63 // pred_fallthru
          _
      $region64: #{probed_mlp.1} parent=5 // pred_fallthru
        _
    $region6: #{probed_mlp.1} parent=1 // loop_footer
      %s24 = sadd.s32 1, %s20
    $region7: #{probed_mlp.1} parent=1 // loop_footer_branch
      %19 = sbr.rel target = $region3
    $region8: #{probed_mlp.1} parent=1 // loop_exit
      _
    %633 = vsyncpa [#allocation4], 1
    %s634 = scalar_lea.sflag [#allocation4], 1
    %635 = vsyncpa %s634, 1
    %636 = vsyncpa [#allocation6], 1
    %s637 = scalar_lea.sflag [#allocation6], 1
    %638 = vsyncpa %s637, 1

</llo_original>
